<compile_context>
chip_gen: v7x
topology: tpu7x:2x2x1
jax: 0.10.0
libtpu: 0.0.40
codegen_flags: <defaults>
</compile_context>

<pallas_src>
import functools

import jax
import jax.numpy as jnp
import numpy as np
from jax.experimental import pallas as pl
from jax.experimental.pallas import tpu as pltpu

NEG_INF = -1e30
LANE = 128


def _round_up(x, m):
    return ((x + m - 1) // m) * m


# ----------------------------------------------------------------------------
# Kernel: one invocation processes all B decode steps (no grid).
# ----------------------------------------------------------------------------
def _decoder_kernel(num_heads, ctx_ref, w_cq_ref, b_cq_ref, k_t_ref, v_ref,
                    w_on_ref, attn_bias_ref, score_bias_ref, probs_ref):
    """
    ctx:        (B, 3E)   context rows (all decode steps)
    w_cq:       (3E, E)   fused (W_ctx @ W_q) / sqrt(head_dim);  b_cq: (1, E)
    k_t:        (E, Np)   projected keys, transposed (N padded to 128 lanes)
    v:          (Np, E)   projected values
    w_on:       (E, Np)   fused (W_o / sqrt(E)) @ nodes^T
    attn_bias:  (B, Np)   -1e30 on invalid / padded keys, 0 elsewhere
    score_bias: (B, Np)   attn_bias + (b_o / sqrt(E)) @ nodes^T
    probs:      (B, Np)   output (padded columns are exactly 0)
    """
    embed_dim = k_t_ref.shape[0]
    head_dim = embed_dim // num_heads

    # Batched query projection: one MXU call for all decode steps.
    q = jnp.dot(ctx_ref[...], w_cq_ref[...],
                preferred_element_type=jnp.float32) + b_cq_ref[...]        # (B, E)

    attn_bias = attn_bias_ref[...]                                         # (B, Np)
    scores = score_bias_ref[...]                                           # (B, Np)

    # Static per-head loop (H is small); everything stays 2D with N on lanes.
    for h in range(num_heads):
        sl = slice(h * head_dim, (h + 1) * head_dim)
        qh = q[:, sl]                                                      # (B, d)
        logits = jnp.dot(qh, k_t_ref[sl, :],
                         preferred_element_type=jnp.float32) + attn_bias   # (B, Np)

        # softmax over keys (lane axis); approx reciprocal is fine here.
        m = jnp.max(logits, axis=-1, keepdims=True)
        p = jnp.exp(logits - m)
        attn = p * pl.reciprocal(jnp.sum(p, axis=-1, keepdims=True),
                                 approx=True)                              # (B, Np)

        head_out = jnp.dot(attn, v_ref[:, sl],
                           preferred_element_type=jnp.float32)             # (B, d)
        # Fused output-projection + node-score contribution of this head.
        scores = scores + jnp.dot(head_out, w_on_ref[sl, :],
                                  preferred_element_type=jnp.float32)      # (B, Np)

    # Final softmax over nodes (exact reciprocal: probs feed log_prob/entropy).
    fm = jnp.max(scores, axis=-1, keepdims=True)
    fp = jnp.exp(scores - fm)
    probs_ref[...] = fp / jnp.sum(fp, axis=-1, keepdims=True)


# ----------------------------------------------------------------------------
# Wrapper: step-invariant fusion (one-time XLA ops) + single pallas_call.
# ----------------------------------------------------------------------------
def decoder_probs_pallas(params, context_vectors, node_embeddings,
                         invalid_action_masks, num_heads):
    """probs over nodes.  context_vectors (B, 3E) or (3E,); masks (B, N) or (N,)."""
    squeeze = context_vectors.ndim == 1
    if squeeze:
        context_vectors = context_vectors[None]
        invalid_action_masks = invalid_action_masks[None]

    b = context_vectors.shape[0]
    n, embed_dim = node_embeddings.shape
    head_dim = embed_dim // num_heads
    n_pad = _round_up(max(n, LANE), LANE)

    inv_sqrt_d = 1.0 / float(head_dim) ** 0.5
    inv_sqrt_e = 1.0 / float(embed_dim) ** 0.5
    f32 = jnp.float32

    # --- step-invariant parameter / node fusion (hoisted out of the kernel) ---
    w_cq = ((params["w_ctx"] @ params["w_q"]) * inv_sqrt_d).astype(f32)        # (3E, E)
    b_cq = ((params["b_ctx"] @ params["w_q"] + params["b_q"]) * inv_sqrt_d
            ).astype(f32)                                                      # (1, E)

    nodes_p = jnp.zeros((n_pad, embed_dim), f32).at[:n].set(
        node_embeddings.astype(f32))                                           # (Np, E)
    k_t = (nodes_p @ params["w_k"] + params["b_k"]).T.astype(f32)              # (E, Np)
    v = (nodes_p @ params["w_v"] + params["b_v"]).astype(f32)                  # (Np, E)

    nodes_t = nodes_p.T                                                        # (E, Np)
    w_on = ((params["w_o"] * inv_sqrt_e) @ nodes_t).astype(f32)                # (E, Np)
    b_on = ((params["b_o"] * inv_sqrt_e) @ nodes_t).astype(f32)                # (1, Np)

    maskf = jnp.where(invalid_action_masks, NEG_INF, 0.0).astype(f32)          # (B, N)
    attn_bias = jnp.full((b, n_pad), NEG_INF, f32).at[:, :n].set(maskf)        # (B, Np)
    score_bias = attn_bias + b_on                                              # (B, Np)

    ctx = context_vectors.reshape(b, 3 * embed_dim).astype(f32)                # (B, 3E)

    operands = (ctx, w_cq, b_cq, k_t, v, w_on, attn_bias, score_bias)
    vmem = pl.BlockSpec(memory_space=pltpu.MemorySpace.VMEM)

    probs = pl.pallas_call(
        functools.partial(_decoder_kernel, num_heads),
        in_specs=[vmem] * len(operands),
        out_specs=vmem,
        out_shape=jax.ShapeDtypeStruct((b, n_pad), jnp.float32),
    )(*operands)

    probs = probs[:, :n]
    return probs[0] if squeeze else probs


# ----------------------------------------------------------------------------
# Module-level forward (action selection lives in the JAX wrapper, not the kernel)
# ----------------------------------------------------------------------------
def attention_decoder_forward(params, context_vector, node_embeddings,
                              invalid_action_mask, num_heads,
                              greedy=True, sample_key=None):
    probs = decoder_probs_pallas(params, context_vector, node_embeddings,
                                 invalid_action_mask, num_heads)
    if greedy:
        action = jnp.argmax(probs)
        entropy = jnp.float32(0.0)
        log_prob = jnp.log(probs[action])
    else:
        # TODO(synk): Categorical sampling/entropy kept as host-side JAX glue
        # (scalar-sized distribution; no Pallas kernel needed).
        logp = jnp.log(jnp.where(probs > 0, probs, 1.0))
        action = jax.random.categorical(sample_key,
                                        jnp.where(probs > 0, logp, -jnp.inf))
        entropy = -jnp.sum(jnp.where(probs > 0, probs * logp, 0.0))
        log_prob = logp[action]
    return action, log_prob, entropy, probs


# ----------------------------------------------------------------------------
# Pure-JAX reference (mirrors the PyTorch forward; masking == gathering valid rows)
# ----------------------------------------------------------------------------
def _reference_probs(params, context, nodes, invalid_mask, num_heads):
    embed_dim = nodes.shape[1]
    d = embed_dim // num_heads
    q_ctx = context @ params["w_ctx"] + params["b_ctx"][0]
    q = q_ctx @ params["w_q"] + params["b_q"][0]
    k = nodes @ params["w_k"] + params["b_k"][0]
    v = nodes @ params["w_v"] + params["b_v"][0]
    qh = q.reshape(num_heads, d)
    kh = k.reshape(-1, num_heads, d)
    vh = v.reshape(-1, num_heads, d)
    logits = jnp.einsum("hd,nhd->nh", qh, kh) / (float(d) ** 0.5)
    logits = jnp.where(invalid_mask[:, None], -jnp.inf, logits)
    attn = jax.nn.softmax(logits, axis=0)
    head_out = jnp.einsum("nh,nhd->hd", attn, vh).reshape(embed_dim)
    attn_out = head_out @ params["w_o"] + params["b_o"][0]
    scores = nodes @ attn_out / (float(embed_dim) ** 0.5)
    scores = jnp.where(invalid_mask, -jnp.inf, scores)
    return jax.nn.softmax(scores)


def init_params(key, embed_dim):
    ks = jax.random.split(key, 10)
    s = 0.2

    def w(k, shape):
        return jax.random.normal(k, shape, jnp.float32) * s

    return {
        "w_ctx": w(ks[0], (3 * embed_dim, embed_dim)),
        "b_ctx": w(ks[1], (1, embed_dim)),
        "w_q":   w(ks[2], (embed_dim, embed_dim)),
        "b_q":   w(ks[3], (1, embed_dim)),
        "w_k":   w(ks[4], (embed_dim, embed_dim)),
        "b_k":   w(ks[5], (1, embed_dim)),
        "w_v":   w(ks[6], (embed_dim, embed_dim)),
        "b_v":   w(ks[7], (1, embed_dim)),
        "w_o":   w(ks[8], (embed_dim, embed_dim)),
        "b_o":   w(ks[9], (1, embed_dim)),
        # NOTE: project_keys / project_values / project_attn_output exist in
        # __init__ but are unused in forward(), so they are omitted here.
    }


if __name__ == "__main__":
    EMBED_DIM = 32
    NUM_HEADS = 4
    NUM_NODES = 16
    BATCH = 8

    root = jax.random.PRNGKey(0)
    k_ctx, k_nodes, k_params, k_bctx, k_bmask = jax.random.split(root, 5)

    context_vector = jax.random.normal(k_ctx, (3 * EMBED_DIM,), jnp.float32)
    node_embeddings = jax.random.normal(k_nodes, (NUM_NODES, EMBED_DIM), jnp.float32)
    invalid_action_mask = jnp.zeros((NUM_NODES,), jnp.bool_).at[
        jnp.array([1, 5, 10])].set(True)

    params = init_params(k_params, EMBED_DIM)

    # --- single-step path (original module semantics; routed through the
    #     batched kernel with B = 1) ---
    action, log_prob, entropy, probs = attention_decoder_forward(
        params, context_vector, node_embeddings, invalid_action_mask,
        NUM_HEADS, greedy=True)
    jax.block_until_ready((action, log_prob, entropy, probs))

    probs_ref = _reference_probs(params, context_vector, node_embeddings,
                                 invalid_action_mask, NUM_HEADS)
    np.testing.assert_allclose(np.asarray(probs), np.asarray(probs_ref),
                               rtol=2e-2, atol=2e-2)
    assert int(action) == int(jnp.argmax(probs_ref))
    assert not bool(invalid_action_mask[int(action)])
    assert np.isfinite(float(log_prob)) and float(entropy) == 0.0

    # --- batched path: B decode steps folded into the matmul rows of ONE call ---
    ctx_batch = jax.random.normal(k_bctx, (BATCH, 3 * EMBED_DIM), jnp.float32)
    mask_batch = jax.random.bernoulli(k_bmask, 0.25, (BATCH, NUM_NODES))
    mask_batch = mask_batch.at[:, 0].set(False)   # ensure >=1 valid node per step

    probs_batch = decoder_probs_pallas(
        params, ctx_batch, node_embeddings, mask_batch, NUM_HEADS)
    jax.block_until_ready(probs_batch)

    for i in range(BATCH):
        ref_i = _reference_probs(params, ctx_batch[i], node_embeddings,
                                 mask_batch[i], NUM_HEADS)
        np.testing.assert_allclose(np.asarray(probs_batch[i]), np.asarray(ref_i),
                                   rtol=2e-2, atol=2e-2)

    print("KERNEL_OK")
</pallas_src>

<mosaic_0001>
module attributes {stable_mosaic.version = 11 : i64} {
  func.func @_decoder_kernel(%arg0: memref<1x96xf32, #tpu.memory_space<vmem>>, %arg1: memref<96x32xf32, #tpu.memory_space<vmem>>, %arg2: memref<1x32xf32, #tpu.memory_space<vmem>>, %arg3: memref<32x128xf32, #tpu.memory_space<vmem>>, %arg4: memref<128x32xf32, #tpu.memory_space<vmem>>, %arg5: memref<32x128xf32, #tpu.memory_space<vmem>>, %arg6: memref<1x128xf32, #tpu.memory_space<vmem>>, %arg7: memref<1x128xf32, #tpu.memory_space<vmem>>, %arg8: memref<1x128xf32, #tpu.memory_space<vmem>>) attributes {dimension_semantics = [], scalar_prefetch = 0 : i64, scratch_operands = 0 : i64, tpu.core_type = #tpu.core_type<tc>} {
    %c0 = arith.constant 0 : index
    %c0_0 = arith.constant 0 : index
    %0 = vector.load %arg0[%c0, %c0_0] : memref<1x96xf32, #tpu.memory_space<vmem>>, vector<1x96xf32>
    %c0_1 = arith.constant 0 : index
    %c0_2 = arith.constant 0 : index
    %1 = vector.load %arg1[%c0_1, %c0_2] : memref<96x32xf32, #tpu.memory_space<vmem>>, vector<96x32xf32>
    %cst = arith.constant dense<0.000000e+00> : vector<1x32xf32>
    %2 = tpu.matmul %0, %1, %cst {dimension_numbers = #tpu.dot_dimension_numbers<[1], [0], [0], [1], [0, 0, 1, 1], [], []>} : vector<1x96xf32>, vector<96x32xf32>, vector<1x32xf32> -> vector<1x32xf32>
    %c0_3 = arith.constant 0 : index
    %c0_4 = arith.constant 0 : index
    %3 = vector.load %arg2[%c0_3, %c0_4] : memref<1x32xf32, #tpu.memory_space<vmem>>, vector<1x32xf32>
    %4 = arith.addf %2, %3 : vector<1x32xf32>
    %c0_5 = arith.constant 0 : index
    %c0_6 = arith.constant 0 : index
    %5 = vector.load %arg6[%c0_5, %c0_6] : memref<1x128xf32, #tpu.memory_space<vmem>>, vector<1x128xf32>
    %c0_7 = arith.constant 0 : index
    %c0_8 = arith.constant 0 : index
    %6 = vector.load %arg7[%c0_7, %c0_8] : memref<1x128xf32, #tpu.memory_space<vmem>>, vector<1x128xf32>
    %7 = vector.extract_strided_slice %4 {offsets = [0, 0], sizes = [1, 8], strides = [1, 1]} : vector<1x32xf32> to vector<1x8xf32>
    %c0_9 = arith.constant 0 : index
    %c0_10 = arith.constant 0 : index
    %8 = vector.load %arg3[%c0_9, %c0_10] : memref<32x128xf32, #tpu.memory_space<vmem>>, vector<8x128xf32>
    %cst_11 = arith.constant dense<0.000000e+00> : vector<1x128xf32>
    %9 = tpu.matmul %7, %8, %cst_11 {dimension_numbers = #tpu.dot_dimension_numbers<[1], [0], [0], [1], [0, 0, 1, 1], [], []>} : vector<1x8xf32>, vector<8x128xf32>, vector<1x128xf32> -> vector<1x128xf32>
    %10 = arith.addf %9, %5 : vector<1x128xf32>
    %cst_12 = arith.constant dense<0xFF800000> : vector<1xf32>
    %11 = vector.multi_reduction <maximumf>, %10, %cst_12 [1] : vector<1x128xf32> to vector<1xf32>
    %12 = vector.shape_cast %11 : vector<1xf32> to vector<1x1xf32>
    %13 = vector.broadcast %12 : vector<1x1xf32> to vector<1x128xf32>
    %14 = arith.subf %10, %13 : vector<1x128xf32>
    %15 = math.exp %14 : vector<1x128xf32>
    %cst_13 = arith.constant dense<0.000000e+00> : vector<1xf32>
    %16 = vector.multi_reduction <add>, %15, %cst_13 [1] : vector<1x128xf32> to vector<1xf32>
    %17 = vector.shape_cast %16 : vector<1xf32> to vector<1x1xf32>
    %18 = tpu.reciprocal %17 {approx = true} : vector<1x1xf32> -> vector<1x1xf32>
    %19 = vector.broadcast %18 : vector<1x1xf32> to vector<1x128xf32>
    %20 = arith.mulf %15, %19 : vector<1x128xf32>
    %c0_14 = arith.constant 0 : index
    %c0_15 = arith.constant 0 : index
    %21 = vector.load %arg4[%c0_14, %c0_15] : memref<128x32xf32, #tpu.memory_space<vmem>>, vector<128x8xf32>
    %cst_16 = arith.constant dense<0.000000e+00> : vector<1x8xf32>
    %22 = tpu.matmul %20, %21, %cst_16 {dimension_numbers = #tpu.dot_dimension_numbers<[1], [0], [0], [1], [0, 0, 1, 1], [], []>} : vector<1x128xf32>, vector<128x8xf32>, vector<1x8xf32> -> vector<1x8xf32>
    %c0_17 = arith.constant 0 : index
    %c0_18 = arith.constant 0 : index
    %23 = vector.load %arg5[%c0_17, %c0_18] : memref<32x128xf32, #tpu.memory_space<vmem>>, vector<8x128xf32>
    %cst_19 = arith.constant dense<0.000000e+00> : vector<1x128xf32>
    %24 = tpu.matmul %22, %23, %cst_19 {dimension_numbers = #tpu.dot_dimension_numbers<[1], [0], [0], [1], [0, 0, 1, 1], [], []>} : vector<1x8xf32>, vector<8x128xf32>, vector<1x128xf32> -> vector<1x128xf32>
    %25 = arith.addf %6, %24 : vector<1x128xf32>
    %26 = vector.extract_strided_slice %4 {offsets = [0, 8], sizes = [1, 8], strides = [1, 1]} : vector<1x32xf32> to vector<1x8xf32>
    %c8 = arith.constant 8 : index
    %c0_20 = arith.constant 0 : index
    %27 = vector.load %arg3[%c8, %c0_20] : memref<32x128xf32, #tpu.memory_space<vmem>>, vector<8x128xf32>
    %cst_21 = arith.constant dense<0.000000e+00> : vector<1x128xf32>
    %28 = tpu.matmul %26, %27, %cst_21 {dimension_numbers = #tpu.dot_dimension_numbers<[1], [0], [0], [1], [0, 0, 1, 1], [], []>} : vector<1x8xf32>, vector<8x128xf32>, vector<1x128xf32> -> vector<1x128xf32>
    %29 = arith.addf %28, %5 : vector<1x128xf32>
    %cst_22 = arith.constant dense<0xFF800000> : vector<1xf32>
    %30 = vector.multi_reduction <maximumf>, %29, %cst_22 [1] : vector<1x128xf32> to vector<1xf32>
    %31 = vector.shape_cast %30 : vector<1xf32> to vector<1x1xf32>
    %32 = vector.broadcast %31 : vector<1x1xf32> to vector<1x128xf32>
    %33 = arith.subf %29, %32 : vector<1x128xf32>
    %34 = math.exp %33 : vector<1x128xf32>
    %cst_23 = arith.constant dense<0.000000e+00> : vector<1xf32>
    %35 = vector.multi_reduction <add>, %34, %cst_23 [1] : vector<1x128xf32> to vector<1xf32>
    %36 = vector.shape_cast %35 : vector<1xf32> to vector<1x1xf32>
    %37 = tpu.reciprocal %36 {approx = true} : vector<1x1xf32> -> vector<1x1xf32>
    %38 = vector.broadcast %37 : vector<1x1xf32> to vector<1x128xf32>
    %39 = arith.mulf %34, %38 : vector<1x128xf32>
    %c0_24 = arith.constant 0 : index
    %c8_25 = arith.constant 8 : index
    %40 = vector.load %arg4[%c0_24, %c8_25] : memref<128x32xf32, #tpu.memory_space<vmem>>, vector<128x8xf32>
    %cst_26 = arith.constant dense<0.000000e+00> : vector<1x8xf32>
    %41 = tpu.matmul %39, %40, %cst_26 {dimension_numbers = #tpu.dot_dimension_numbers<[1], [0], [0], [1], [0, 0, 1, 1], [], []>} : vector<1x128xf32>, vector<128x8xf32>, vector<1x8xf32> -> vector<1x8xf32>
    %c8_27 = arith.constant 8 : index
    %c0_28 = arith.constant 0 : index
    %42 = vector.load %arg5[%c8_27, %c0_28] : memref<32x128xf32, #tpu.memory_space<vmem>>, vector<8x128xf32>
    %cst_29 = arith.constant dense<0.000000e+00> : vector<1x128xf32>
    %43 = tpu.matmul %41, %42, %cst_29 {dimension_numbers = #tpu.dot_dimension_numbers<[1], [0], [0], [1], [0, 0, 1, 1], [], []>} : vector<1x8xf32>, vector<8x128xf32>, vector<1x128xf32> -> vector<1x128xf32>
    %44 = arith.addf %25, %43 : vector<1x128xf32>
    %45 = vector.extract_strided_slice %4 {offsets = [0, 16], sizes = [1, 8], strides = [1, 1]} : vector<1x32xf32> to vector<1x8xf32>
    %c16 = arith.constant 16 : index
    %c0_30 = arith.constant 0 : index
    %46 = vector.load %arg3[%c16, %c0_30] : memref<32x128xf32, #tpu.memory_space<vmem>>, vector<8x128xf32>
    %cst_31 = arith.constant dense<0.000000e+00> : vector<1x128xf32>
    %47 = tpu.matmul %45, %46, %cst_31 {dimension_numbers = #tpu.dot_dimension_numbers<[1], [0], [0], [1], [0, 0, 1, 1], [], []>} : vector<1x8xf32>, vector<8x128xf32>, vector<1x128xf32> -> vector<1x128xf32>
    %48 = arith.addf %47, %5 : vector<1x128xf32>
    %cst_32 = arith.constant dense<0xFF800000> : vector<1xf32>
    %49 = vector.multi_reduction <maximumf>, %48, %cst_32 [1] : vector<1x128xf32> to vector<1xf32>
    %50 = vector.shape_cast %49 : vector<1xf32> to vector<1x1xf32>
    %51 = vector.broadcast %50 : vector<1x1xf32> to vector<1x128xf32>
    %52 = arith.subf %48, %51 : vector<1x128xf32>
    %53 = math.exp %52 : vector<1x128xf32>
    %cst_33 = arith.constant dense<0.000000e+00> : vector<1xf32>
    %54 = vector.multi_reduction <add>, %53, %cst_33 [1] : vector<1x128xf32> to vector<1xf32>
    %55 = vector.shape_cast %54 : vector<1xf32> to vector<1x1xf32>
    %56 = tpu.reciprocal %55 {approx = true} : vector<1x1xf32> -> vector<1x1xf32>
    %57 = vector.broadcast %56 : vector<1x1xf32> to vector<1x128xf32>
    %58 = arith.mulf %53, %57 : vector<1x128xf32>
    %c0_34 = arith.constant 0 : index
    %c16_35 = arith.constant 16 : index
    %59 = vector.load %arg4[%c0_34, %c16_35] : memref<128x32xf32, #tpu.memory_space<vmem>>, vector<128x8xf32>
    %cst_36 = arith.constant dense<0.000000e+00> : vector<1x8xf32>
    %60 = tpu.matmul %58, %59, %cst_36 {dimension_numbers = #tpu.dot_dimension_numbers<[1], [0], [0], [1], [0, 0, 1, 1], [], []>} : vector<1x128xf32>, vector<128x8xf32>, vector<1x8xf32> -> vector<1x8xf32>
    %c16_37 = arith.constant 16 : index
    %c0_38 = arith.constant 0 : index
    %61 = vector.load %arg5[%c16_37, %c0_38] : memref<32x128xf32, #tpu.memory_space<vmem>>, vector<8x128xf32>
    %cst_39 = arith.constant dense<0.000000e+00> : vector<1x128xf32>
    %62 = tpu.matmul %60, %61, %cst_39 {dimension_numbers = #tpu.dot_dimension_numbers<[1], [0], [0], [1], [0, 0, 1, 1], [], []>} : vector<1x8xf32>, vector<8x128xf32>, vector<1x128xf32> -> vector<1x128xf32>
    %63 = arith.addf %44, %62 : vector<1x128xf32>
    %64 = vector.extract_strided_slice %4 {offsets = [0, 24], sizes = [1, 8], strides = [1, 1]} : vector<1x32xf32> to vector<1x8xf32>
    %c24 = arith.constant 24 : index
    %c0_40 = arith.constant 0 : index
    %65 = vector.load %arg3[%c24, %c0_40] : memref<32x128xf32, #tpu.memory_space<vmem>>, vector<8x128xf32>
    %cst_41 = arith.constant dense<0.000000e+00> : vector<1x128xf32>
    %66 = tpu.matmul %64, %65, %cst_41 {dimension_numbers = #tpu.dot_dimension_numbers<[1], [0], [0], [1], [0, 0, 1, 1], [], []>} : vector<1x8xf32>, vector<8x128xf32>, vector<1x128xf32> -> vector<1x128xf32>
    %67 = arith.addf %66, %5 : vector<1x128xf32>
    %cst_42 = arith.constant dense<0xFF800000> : vector<1xf32>
    %68 = vector.multi_reduction <maximumf>, %67, %cst_42 [1] : vector<1x128xf32> to vector<1xf32>
    %69 = vector.shape_cast %68 : vector<1xf32> to vector<1x1xf32>
    %70 = vector.broadcast %69 : vector<1x1xf32> to vector<1x128xf32>
    %71 = arith.subf %67, %70 : vector<1x128xf32>
    %72 = math.exp %71 : vector<1x128xf32>
    %cst_43 = arith.constant dense<0.000000e+00> : vector<1xf32>
    %73 = vector.multi_reduction <add>, %72, %cst_43 [1] : vector<1x128xf32> to vector<1xf32>
    %74 = vector.shape_cast %73 : vector<1xf32> to vector<1x1xf32>
    %75 = tpu.reciprocal %74 {approx = true} : vector<1x1xf32> -> vector<1x1xf32>
    %76 = vector.broadcast %75 : vector<1x1xf32> to vector<1x128xf32>
    %77 = arith.mulf %72, %76 : vector<1x128xf32>
    %c0_44 = arith.constant 0 : index
    %c24_45 = arith.constant 24 : index
    %78 = vector.load %arg4[%c0_44, %c24_45] : memref<128x32xf32, #tpu.memory_space<vmem>>, vector<128x8xf32>
    %cst_46 = arith.constant dense<0.000000e+00> : vector<1x8xf32>
    %79 = tpu.matmul %77, %78, %cst_46 {dimension_numbers = #tpu.dot_dimension_numbers<[1], [0], [0], [1], [0, 0, 1, 1], [], []>} : vector<1x128xf32>, vector<128x8xf32>, vector<1x8xf32> -> vector<1x8xf32>
    %c24_47 = arith.constant 24 : index
    %c0_48 = arith.constant 0 : index
    %80 = vector.load %arg5[%c24_47, %c0_48] : memref<32x128xf32, #tpu.memory_space<vmem>>, vector<8x128xf32>
    %cst_49 = arith.constant dense<0.000000e+00> : vector<1x128xf32>
    %81 = tpu.matmul %79, %80, %cst_49 {dimension_numbers = #tpu.dot_dimension_numbers<[1], [0], [0], [1], [0, 0, 1, 1], [], []>} : vector<1x8xf32>, vector<8x128xf32>, vector<1x128xf32> -> vector<1x128xf32>
    %82 = arith.addf %63, %81 : vector<1x128xf32>
    %cst_50 = arith.constant dense<0xFF800000> : vector<1xf32>
    %83 = vector.multi_reduction <maximumf>, %82, %cst_50 [1] : vector<1x128xf32> to vector<1xf32>
    %84 = vector.shape_cast %83 : vector<1xf32> to vector<1x1xf32>
    %85 = vector.broadcast %84 : vector<1x1xf32> to vector<1x128xf32>
    %86 = arith.subf %82, %85 : vector<1x128xf32>
    %87 = math.exp %86 : vector<1x128xf32>
    %cst_51 = arith.constant dense<0.000000e+00> : vector<1xf32>
    %88 = vector.multi_reduction <add>, %87, %cst_51 [1] : vector<1x128xf32> to vector<1xf32>
    %89 = vector.shape_cast %88 : vector<1xf32> to vector<1x1xf32>
    %90 = vector.broadcast %89 : vector<1x1xf32> to vector<1x128xf32>
    %91 = arith.divf %87, %90 : vector<1x128xf32>
    %c0_52 = arith.constant 0 : index
    %c0_53 = arith.constant 0 : index
    %92 = vector.load %arg8[%c0_52, %c0_53] : memref<1x128xf32, #tpu.memory_space<vmem>>, vector<1x128xf32>
    tpu.vector_store %arg8[%c0_52, %c0_53], %91 {strides = array<i32>} : memref<1x128xf32, #tpu.memory_space<vmem>>, vector<1x128xf32>,
    return
  }
}

</mosaic_0001>

<llo_original>
// kernel: tpu_custom_call.1
$region0: #{tpu_custom_call.1}
  #allocation0 [shape = 'u32[]', space=smem, size = 0x4, offset = 0x4, fixed_abs, tag = 'smem constant byte address 0x4 - core index']
  #allocation1 [shape = 'u32[144,128]{1,0:T(1,128)}', space=vmem, size = 0x12000, scoped, tag = 'internal scratch']
  %s0 = inlined_call_operand.vmem [shape: f32[1,96], index: 0, kind: input, shape index: {}]
  %s1 = inlined_call_operand.vmem [shape: f32[96,32], index: 1, kind: input, shape index: {}]
  %s2 = inlined_call_operand.vmem [shape: f32[1,32], index: 2, kind: input, shape index: {}]
  %s3 = inlined_call_operand.vmem [shape: f32[32,128], index: 3, kind: input, shape index: {}]
  %s4 = inlined_call_operand.vmem [shape: f32[128,32], index: 4, kind: input, shape index: {}]
  %s5 = inlined_call_operand.vmem [shape: f32[32,128], index: 5, kind: input, shape index: {}]
  %s6 = inlined_call_operand.vmem [shape: f32[1,128], index: 6, kind: input, shape index: {}]
  %s7 = inlined_call_operand.vmem [shape: f32[1,128], index: 7, kind: input, shape index: {}]
  %s8 = inlined_call_operand.hbm [shape: f32[1,128], index: 8, kind: output, shape index: {}]
  %s9 = sld [smem:[#allocation0]]
  $region42: #{tpu_custom_call.1} parent=0
    _
  %s11 = ssub.s32 1, %s9
  %s12 = scalar_select 0, %s11, %s9
  $region1: #{tpu_custom_call.1} parent=0
    #allocation2 [shape = 'u8[512]{0}', space=vmem, size = 0x400, scoped, tag = 'output window, operand 0, single buffered']
    #allocation3 [shape = 's32[1]{0}', space=sflag, size = 0x4, scoped, tag = 'scoped memory for tpu_custom_call.1']
    %13 = vsyncpa [#allocation3], 0
    // Predicated region
    $region2: #{tpu_custom_call.1} parent=1 // pred_check
      _
    $region3: #{tpu_custom_call.1} parent=1 // pred_check_branch
      %15 = sbr.rel (0) target = $region5
    $region4: #{tpu_custom_call.1} parent=1 // pred_region
      _
    $region5: #{tpu_custom_call.1} parent=1 // pred_fallthru
      _
    // Predicated region
    $region6: #{tpu_custom_call.1} parent=1 // pred_check
      _
    $region7: #{tpu_custom_call.1} parent=1 // pred_check_branch
      %17 = sbr.rel (0) target = $region9
    $region8: #{tpu_custom_call.1} parent=1 // pred_region
      _
    $region9: #{tpu_custom_call.1} parent=1 // pred_fallthru
      _
    // Predicated region
    $region10: #{tpu_custom_call.1} parent=1 // pred_check
      _
    $region11: #{tpu_custom_call.1} parent=1 // pred_check_branch
      %19 = sbr.rel (0) target = $region13
    $region12: #{tpu_custom_call.1} parent=1 // pred_region
      _
    $region13: #{tpu_custom_call.1} parent=1 // pred_fallthru
      _
    // Predicated region
    $region14: #{tpu_custom_call.1} parent=1 // pred_check
      _
    $region15: #{tpu_custom_call.1} parent=1 // pred_check_branch
      %21 = sbr.rel (0) target = $region17
    $region16: #{tpu_custom_call.1} parent=1 // pred_region
      _
    $region17: #{tpu_custom_call.1} parent=1 // pred_fallthru
      _
    // Predicated region
    $region18: #{tpu_custom_call.1} parent=1 // pred_check
      _
    $region19: #{tpu_custom_call.1} parent=1 // pred_check_branch
      %23 = sbr.rel (0) target = $region21
    $region20: #{tpu_custom_call.1} parent=1 // pred_region
      _
    $region21: #{tpu_custom_call.1} parent=1 // pred_fallthru
      _
    // Predicated region
    $region22: #{tpu_custom_call.1} parent=1 // pred_check
      _
    $region23: #{tpu_custom_call.1} parent=1 // pred_check_branch
      %25 = sbr.rel (0) target = $region25
    $region24: #{tpu_custom_call.1} parent=1 // pred_region
      _
    $region25: #{tpu_custom_call.1} parent=1 // pred_fallthru
      _
    // Predicated region
    $region26: #{tpu_custom_call.1} parent=1 // pred_check
      _
    $region27: #{tpu_custom_call.1} parent=1 // pred_check_branch
      %27 = sbr.rel (0) target = $region29
    $region28: #{tpu_custom_call.1} parent=1 // pred_region
      _
    $region29: #{tpu_custom_call.1} parent=1 // pred_fallthru
      _
    // Predicated region
    $region30: #{tpu_custom_call.1} parent=1 // pred_check
      _
    $region31: #{tpu_custom_call.1} parent=1 // pred_check_branch
      %29 = sbr.rel (0) target = $region33
    $region32: #{tpu_custom_call.1} parent=1 // pred_region
      _
    $region33: #{tpu_custom_call.1} parent=1 // pred_fallthru
      _
    %v30 = vld [vmem:[%s0] sm:$0x1]
    %v31 = vld [vmem:[%s1] sm:$0xff]
    %v32 = vld [vmem:[%s1 + $0x8] sm:$0xff]
    %v33 = vld [vmem:[%s1 + $0x10] sm:$0xff]
    %v34 = vld [vmem:[%s1 + $0x18] sm:$0xff]
    %v35 = vld [vmem:[%s1 + $0x20] sm:$0xff]
    %v36 = vld [vmem:[%s1 + $0x28] sm:$0xff]
    %v37 = vld [vmem:[%s1 + $0x30] sm:$0xff]
    %v38 = vld [vmem:[%s1 + $0x38] sm:$0xff]
    %v39 = vld [vmem:[%s1 + $0x40] sm:$0xff]
    %v40 = vld [vmem:[%s1 + $0x48] sm:$0xff]
    %v41 = vld [vmem:[%s1 + $0x50] sm:$0xff]
    %v42 = vld [vmem:[%s1 + $0x58] sm:$0xff]
    %v43 = vld [vmem:[%s2] sm:$0x1]
    %vm44 = vcmask 785408
    %v46 = vsel %vm44, %v30, 0
    %48 = vmatprep.subr.mxu0 0.0
    %49 = vmatpush1.msra.mxu0 %v31
    %50 = vmatprep.subr.mxu0 0.0
    %51 = vmatpush1.msra.mxu0 %v32
    %52 = vmatprep.subr.mxu0 0.0
    %53 = vmatpush1.msra.mxu0 %v33
    %54 = vmatprep.subr.mxu0 0.0
    %55 = vmatpush1.msra.mxu0 %v34
    %56 = vmatprep.subr.mxu0 0.0
    %57 = vmatpush1.msra.mxu0 %v35
    %58 = vmatprep.subr.mxu0 0.0
    %59 = vmatpush1.msra.mxu0 %v36
    %60 = vmatprep.subr.mxu0 0.0
    %61 = vmatpush1.msra.mxu0 %v37
    %62 = vmatprep.subr.mxu0 0.0
    %63 = vmatpush1.msra.mxu0 %v38
    %64 = vmatprep.subr.mxu0 0.0
    %65 = vmatpush1.msra.mxu0 %v39
    %66 = vmatprep.subr.mxu0 0.0
    %67 = vmatpush1.msra.mxu0 %v40
    %68 = vmatprep.subr.mxu0 0.0
    %69 = vmatpush1.msra.mxu0 %v41
    %70 = vmatprep.subr.mxu0 0.0
    %71 = vmatpush1.msra.mxu0 %v42
    %72 = vmatprep.subr.mxu0 0.0
    %73 = vmatpush1.msra.mxu0 0.0
    %74 = vmatprep.subr.mxu0 0.0
    %75 = vmatpush1.msra.mxu0 0.0
    %76 = vmatprep.subr.mxu0 0.0
    %77 = vmatpush1.msra.mxu0 0.0
    %78 = vmatprep.subr.mxu0 0.0
    %79 = vmatpush1.msra.mxu0 0.0
    %80 = vmatprep.subr.mxu0 0.0
    %81 = vmatpush1.msra.mxu0 0.0
    %82 = vmatprep.subr.mxu0 0.0
    %83 = vmatpush1.msra.mxu0 0.0
    %84 = vmatprep.subr.mxu0 0.0
    %85 = vmatpush1.msra.mxu0 0.0
    %86 = vmatprep.subr.mxu0 0.0
    %87 = vmatpush1.msra.mxu0 0.0
    %88 = vmatprep.subr.mxu0 0.0
    %89 = vmatpush1.msra.mxu0 0.0
    %90 = vmatprep.subr.mxu0 0.0
    %91 = vmatpush1.msra.mxu0 0.0
    %92 = vmatprep.subr.mxu0 0.0
    %93 = vmatpush1.msra.mxu0 0.0
    %94 = vmatprep.subr.mxu0 0.0
    %95 = vmatpush1.msra.mxu0 0.0
    %96 = vmatprep.subr.mxu0 0.0
    %97 = vmatpush1.msra.mxu0 0.0
    %98 = vmatprep.subr.mxu0 0.0
    %99 = vmatpush1.msra.mxu0 0.0
    %100 = vmatprep.subr.mxu0 0.0
    %101 = vmatpush1.msra.mxu0 0.0
    %102 = vmatprep.subr.mxu0 0.0
    %103 = vmatpush1.msra.mxu0 0.0
    %104 = vmatprep.subr.mxu0 0.0
    %105 = vmatpush1.msra.mxu0 0.0
    %106 = vmatprep.subr.mxu0 0.0
    %107 = vmatpush1.msra.mxu0 0.0
    %108 = vmatprep.subr.mxu0 0.0
    %109 = vmatpush1.msra.mxu0 0.0
    %110 = vmatprep.subr.mxu0 0.0
    %111 = vmatpush1.msra.mxu0 0.0
    %112 = vmatprep.mubr.f32.mxu0 0.0
    %113 = vmatmul.mubr.f32.gmra.mrb[0].mxu0 %v46
    %v114 = vpop.f32.mrb[0].mxu0
    %v115 = vadd.f32 %v43, %v114
    %v116 = vpop.f32.mrb[0].mxu0
    %117 = vdwg.mxu0
    %v118 = vld [vmem:[%s6] sm:$0x1]
    %v119 = vld [vmem:[%s7] sm:$0x1]
    %v120 = vld [vmem:[%s3] sm:$0xff]
    %vm121 = vcmask 64512
    %v123 = vsel %vm121, %v115, 0
    %125 = vmatprep.subr.mxu0 0.0
    %126 = vmatpush1.msra.mxu0 %v120
    %127 = vmatprep.subr.mxu0 0.0
    %128 = vmatpush1.msra.mxu0 0.0
    %129 = vmatprep.subr.mxu0 0.0
    %130 = vmatpush1.msra.mxu0 0.0
    %131 = vmatprep.subr.mxu0 0.0
    %132 = vmatpush1.msra.mxu0 0.0
    %133 = vmatprep.subr.mxu0 0.0
    %134 = vmatpush1.msra.mxu0 0.0
    %135 = vmatprep.subr.mxu0 0.0
    %136 = vmatpush1.msra.mxu0 0.0
    %137 = vmatprep.subr.mxu0 0.0
    %138 = vmatpush1.msra.mxu0 0.0
    %139 = vmatprep.subr.mxu0 0.0
    %140 = vmatpush1.msra.mxu0 0.0
    %141 = vmatprep.subr.mxu0 0.0
    %142 = vmatpush1.msra.mxu0 0.0
    %143 = vmatprep.subr.mxu0 0.0
    %144 = vmatpush1.msra.mxu0 0.0
    %145 = vmatprep.subr.mxu0 0.0
    %146 = vmatpush1.msra.mxu0 0.0
    %147 = vmatprep.subr.mxu0 0.0
    %148 = vmatpush1.msra.mxu0 0.0
    %149 = vmatprep.subr.mxu0 0.0
    %150 = vmatpush1.msra.mxu0 0.0
    %151 = vmatprep.subr.mxu0 0.0
    %152 = vmatpush1.msra.mxu0 0.0
    %153 = vmatprep.subr.mxu0 0.0
    %154 = vmatpush1.msra.mxu0 0.0
    %155 = vmatprep.subr.mxu0 0.0
    %156 = vmatpush1.msra.mxu0 0.0
    %157 = vmatprep.subr.mxu0 0.0
    %158 = vmatpush1.msra.mxu0 0.0
    %159 = vmatprep.subr.mxu0 0.0
    %160 = vmatpush1.msra.mxu0 0.0
    %161 = vmatprep.subr.mxu0 0.0
    %162 = vmatpush1.msra.mxu0 0.0
    %163 = vmatprep.subr.mxu0 0.0
    %164 = vmatpush1.msra.mxu0 0.0
    %165 = vmatprep.subr.mxu0 0.0
    %166 = vmatpush1.msra.mxu0 0.0
    %167 = vmatprep.subr.mxu0 0.0
    %168 = vmatpush1.msra.mxu0 0.0
    %169 = vmatprep.subr.mxu0 0.0
    %170 = vmatpush1.msra.mxu0 0.0
    %171 = vmatprep.subr.mxu0 0.0
    %172 = vmatpush1.msra.mxu0 0.0
    %173 = vmatprep.subr.mxu0 0.0
    %174 = vmatpush1.msra.mxu0 0.0
    %175 = vmatprep.subr.mxu0 0.0
    %176 = vmatpush1.msra.mxu0 0.0
    %177 = vmatprep.subr.mxu0 0.0
    %178 = vmatpush1.msra.mxu0 0.0
    %179 = vmatprep.subr.mxu0 0.0
    %180 = vmatpush1.msra.mxu0 0.0
    %181 = vmatprep.subr.mxu0 0.0
    %182 = vmatpush1.msra.mxu0 0.0
    %183 = vmatprep.subr.mxu0 0.0
    %184 = vmatpush1.msra.mxu0 0.0
    %185 = vmatprep.subr.mxu0 0.0
    %186 = vmatpush1.msra.mxu0 0.0
    %187 = vmatprep.subr.mxu0 0.0
    %188 = vmatpush1.msra.mxu0 0.0
    %189 = vmatprep.mubr.f32.mxu0 0.0
    %190 = vmatmul.mubr.f32.gmra.mrb[0].mxu0 %v123
    %v191 = vpop.f32.mrb[0].mxu0
    %v192 = vadd.f32 %v118, %v191
    %v193 = vpop.f32.mrb[0].mxu0
    %194 = vdwg.mxu0
    %vm195 = vcmask 1040384
    %v196 = vsel %vm195, %v192, -inf
    %197 = vmax.xlane.f32.xlu0 %v196
    %v198 = vpop.xlane.xlu0 %197
    %v199 = vsub.f32 %v192, %v198
    %v200 = vmul.f32 %v199, 1.442695
    %v201 = vpow.pop %v200
    %v202 = vsel %vm195, %v201, 0.0
    %203 = vadd.xlane.f32.xlu0 %v202
    %v204 = vpop.xlane.xlu0 %203
    %v205 = vrcp.pop %v204
    %v206 = vmul.f32 %v201, %v205
    %v207 = vld [vmem:[%s4] sm:$0xff]
    %v208 = vld [vmem:[%s4 + $0x8] sm:$0xff]
    %v209 = vld [vmem:[%s4 + $0x10] sm:$0xff]
    %v210 = vld [vmem:[%s4 + $0x18] sm:$0xff]
    %v211 = vld [vmem:[%s4 + $0x20] sm:$0xff]
    %v212 = vld [vmem:[%s4 + $0x28] sm:$0xff]
    %v213 = vld [vmem:[%s4 + $0x30] sm:$0xff]
    %v214 = vld [vmem:[%s4 + $0x38] sm:$0xff]
    %v215 = vld [vmem:[%s4 + $0x40] sm:$0xff]
    %v216 = vld [vmem:[%s4 + $0x48] sm:$0xff]
    %v217 = vld [vmem:[%s4 + $0x50] sm:$0xff]
    %v218 = vld [vmem:[%s4 + $0x58] sm:$0xff]
    %v219 = vld [vmem:[%s4 + $0x60] sm:$0xff]
    %v220 = vld [vmem:[%s4 + $0x68] sm:$0xff]
    %v221 = vld [vmem:[%s4 + $0x70] sm:$0xff]
    %v222 = vld [vmem:[%s4 + $0x78] sm:$0xff]
    %223 = vmatprep.subr.mxu0 0.0
    %224 = vmatpush1.msra.mxu0 %v207
    %225 = vmatprep.subr.mxu0 0.0
    %226 = vmatpush1.msra.mxu0 %v208
    %227 = vmatprep.subr.mxu0 0.0
    %228 = vmatpush1.msra.mxu0 %v209
    %229 = vmatprep.subr.mxu0 0.0
    %230 = vmatpush1.msra.mxu0 %v210
    %231 = vmatprep.subr.mxu0 0.0
    %232 = vmatpush1.msra.mxu0 %v211
    %233 = vmatprep.subr.mxu0 0.0
    %234 = vmatpush1.msra.mxu0 %v212
    %235 = vmatprep.subr.mxu0 0.0
    %236 = vmatpush1.msra.mxu0 %v213
    %237 = vmatprep.subr.mxu0 0.0
    %238 = vmatpush1.msra.mxu0 %v214
    %239 = vmatprep.subr.mxu0 0.0
    %240 = vmatpush1.msra.mxu0 %v215
    %241 = vmatprep.subr.mxu0 0.0
    %242 = vmatpush1.msra.mxu0 %v216
    %243 = vmatprep.subr.mxu0 0.0
    %244 = vmatpush1.msra.mxu0 %v217
    %245 = vmatprep.subr.mxu0 0.0
    %246 = vmatpush1.msra.mxu0 %v218
    %247 = vmatprep.subr.mxu0 0.0
    %248 = vmatpush1.msra.mxu0 %v219
    %249 = vmatprep.subr.mxu0 0.0
    %250 = vmatpush1.msra.mxu0 %v220
    %251 = vmatprep.subr.mxu0 0.0
    %252 = vmatpush1.msra.mxu0 %v221
    %253 = vmatprep.subr.mxu0 0.0
    %254 = vmatpush1.msra.mxu0 %v222
    %255 = vmatprep.subr.mxu0 0.0
    %256 = vmatpush1.msra.mxu0 0.0
    %257 = vmatprep.subr.mxu0 0.0
    %258 = vmatpush1.msra.mxu0 0.0
    %259 = vmatprep.subr.mxu0 0.0
    %260 = vmatpush1.msra.mxu0 0.0
    %261 = vmatprep.subr.mxu0 0.0
    %262 = vmatpush1.msra.mxu0 0.0
    %263 = vmatprep.subr.mxu0 0.0
    %264 = vmatpush1.msra.mxu0 0.0
    %265 = vmatprep.subr.mxu0 0.0
    %266 = vmatpush1.msra.mxu0 0.0
    %267 = vmatprep.subr.mxu0 0.0
    %268 = vmatpush1.msra.mxu0 0.0
    %269 = vmatprep.subr.mxu0 0.0
    %270 = vmatpush1.msra.mxu0 0.0
    %271 = vmatprep.subr.mxu0 0.0
    %272 = vmatpush1.msra.mxu0 0.0
    %273 = vmatprep.subr.mxu0 0.0
    %274 = vmatpush1.msra.mxu0 0.0
    %275 = vmatprep.subr.mxu0 0.0
    %276 = vmatpush1.msra.mxu0 0.0
    %277 = vmatprep.subr.mxu0 0.0
    %278 = vmatpush1.msra.mxu0 0.0
    %279 = vmatprep.subr.mxu0 0.0
    %280 = vmatpush1.msra.mxu0 0.0
    %281 = vmatprep.subr.mxu0 0.0
    %282 = vmatpush1.msra.mxu0 0.0
    %283 = vmatprep.subr.mxu0 0.0
    %284 = vmatpush1.msra.mxu0 0.0
    %285 = vmatprep.subr.mxu0 0.0
    %286 = vmatpush1.msra.mxu0 0.0
    %287 = vmatprep.mubr.f32.mxu0 0.0
    %288 = vmatmul.mubr.f32.gmra.mrb[0].mxu0 %v206
    %v289 = vpop.f32.mrb[0].mxu0
    %v290 = vadd.f32 0.0, %v289
    %v291 = vpop.f32.mrb[0].mxu0
    %292 = vdwg.mxu0
    %v293 = vld [vmem:[%s5] sm:$0xff]
    %v295 = vsel %vm121, %v290, 0
    %297 = vmatprep.subr.mxu0 0.0
    %298 = vmatpush1.msra.mxu0 %v293
    %299 = vmatprep.subr.mxu0 0.0
    %300 = vmatpush1.msra.mxu0 0.0
    %301 = vmatprep.subr.mxu0 0.0
    %302 = vmatpush1.msra.mxu0 0.0
    %303 = vmatprep.subr.mxu0 0.0
    %304 = vmatpush1.msra.mxu0 0.0
    %305 = vmatprep.subr.mxu0 0.0
    %306 = vmatpush1.msra.mxu0 0.0
    %307 = vmatprep.subr.mxu0 0.0
    %308 = vmatpush1.msra.mxu0 0.0
    %309 = vmatprep.subr.mxu0 0.0
    %310 = vmatpush1.msra.mxu0 0.0
    %311 = vmatprep.subr.mxu0 0.0
    %312 = vmatpush1.msra.mxu0 0.0
    %313 = vmatprep.subr.mxu0 0.0
    %314 = vmatpush1.msra.mxu0 0.0
    %315 = vmatprep.subr.mxu0 0.0
    %316 = vmatpush1.msra.mxu0 0.0
    %317 = vmatprep.subr.mxu0 0.0
    %318 = vmatpush1.msra.mxu0 0.0
    %319 = vmatprep.subr.mxu0 0.0
    %320 = vmatpush1.msra.mxu0 0.0
    %321 = vmatprep.subr.mxu0 0.0
    %322 = vmatpush1.msra.mxu0 0.0
    %323 = vmatprep.subr.mxu0 0.0
    %324 = vmatpush1.msra.mxu0 0.0
    %325 = vmatprep.subr.mxu0 0.0
    %326 = vmatpush1.msra.mxu0 0.0
    %327 = vmatprep.subr.mxu0 0.0
    %328 = vmatpush1.msra.mxu0 0.0
    %329 = vmatprep.subr.mxu0 0.0
    %330 = vmatpush1.msra.mxu0 0.0
    %331 = vmatprep.subr.mxu0 0.0
    %332 = vmatpush1.msra.mxu0 0.0
    %333 = vmatprep.subr.mxu0 0.0
    %334 = vmatpush1.msra.mxu0 0.0
    %335 = vmatprep.subr.mxu0 0.0
    %336 = vmatpush1.msra.mxu0 0.0
    %337 = vmatprep.subr.mxu0 0.0
    %338 = vmatpush1.msra.mxu0 0.0
    %339 = vmatprep.subr.mxu0 0.0
    %340 = vmatpush1.msra.mxu0 0.0
    %341 = vmatprep.subr.mxu0 0.0
    %342 = vmatpush1.msra.mxu0 0.0
    %343 = vmatprep.subr.mxu0 0.0
    %344 = vmatpush1.msra.mxu0 0.0
    %345 = vmatprep.subr.mxu0 0.0
    %346 = vmatpush1.msra.mxu0 0.0
    %347 = vmatprep.subr.mxu0 0.0
    %348 = vmatpush1.msra.mxu0 0.0
    %349 = vmatprep.subr.mxu0 0.0
    %350 = vmatpush1.msra.mxu0 0.0
    %351 = vmatprep.subr.mxu0 0.0
    %352 = vmatpush1.msra.mxu0 0.0
    %353 = vmatprep.subr.mxu0 0.0
    %354 = vmatpush1.msra.mxu0 0.0
    %355 = vmatprep.subr.mxu0 0.0
    %356 = vmatpush1.msra.mxu0 0.0
    %357 = vmatprep.subr.mxu0 0.0
    %358 = vmatpush1.msra.mxu0 0.0
    %359 = vmatprep.subr.mxu0 0.0
    %360 = vmatpush1.msra.mxu0 0.0
    %361 = vmatprep.mubr.f32.mxu0 0.0
    %362 = vmatmul.mubr.f32.gmra.mrb[0].mxu0 %v295
    %v363 = vpop.f32.mrb[0].mxu0
    %v364 = vadd.f32 0.0, %v363
    %v365 = vpop.f32.mrb[0].mxu0
    %366 = vdwg.mxu0
    %v367 = vadd.f32 %v119, %v364
    %v368 = vld [vmem:[%s3 + $0x8] sm:$0xff]
    %369 = vrot.lane.b32.xlu0 %v115, 120
    %v370 = vpop.permute.xlu0 %369
    %v371 = vsel %vm121, %v370, 0
    %373 = vmatprep.subr.mxu0 0.0
    %374 = vmatpush1.msra.mxu0 %v368
    %375 = vmatprep.subr.mxu0 0.0
    %376 = vmatpush1.msra.mxu0 0.0
    %377 = vmatprep.subr.mxu0 0.0
    %378 = vmatpush1.msra.mxu0 0.0
    %379 = vmatprep.subr.mxu0 0.0
    %380 = vmatpush1.msra.mxu0 0.0
    %381 = vmatprep.subr.mxu0 0.0
    %382 = vmatpush1.msra.mxu0 0.0
    %383 = vmatprep.subr.mxu0 0.0
    %384 = vmatpush1.msra.mxu0 0.0
    %385 = vmatprep.subr.mxu0 0.0
    %386 = vmatpush1.msra.mxu0 0.0
    %387 = vmatprep.subr.mxu0 0.0
    %388 = vmatpush1.msra.mxu0 0.0
    %389 = vmatprep.subr.mxu0 0.0
    %390 = vmatpush1.msra.mxu0 0.0
    %391 = vmatprep.subr.mxu0 0.0
    %392 = vmatpush1.msra.mxu0 0.0
    %393 = vmatprep.subr.mxu0 0.0
    %394 = vmatpush1.msra.mxu0 0.0
    %395 = vmatprep.subr.mxu0 0.0
    %396 = vmatpush1.msra.mxu0 0.0
    %397 = vmatprep.subr.mxu0 0.0
    %398 = vmatpush1.msra.mxu0 0.0
    %399 = vmatprep.subr.mxu0 0.0
    %400 = vmatpush1.msra.mxu0 0.0
    %401 = vmatprep.subr.mxu0 0.0
    %402 = vmatpush1.msra.mxu0 0.0
    %403 = vmatprep.subr.mxu0 0.0
    %404 = vmatpush1.msra.mxu0 0.0
    %405 = vmatprep.subr.mxu0 0.0
    %406 = vmatpush1.msra.mxu0 0.0
    %407 = vmatprep.subr.mxu0 0.0
    %408 = vmatpush1.msra.mxu0 0.0
    %409 = vmatprep.subr.mxu0 0.0
    %410 = vmatpush1.msra.mxu0 0.0
    %411 = vmatprep.subr.mxu0 0.0
    %412 = vmatpush1.msra.mxu0 0.0
    %413 = vmatprep.subr.mxu0 0.0
    %414 = vmatpush1.msra.mxu0 0.0
    %415 = vmatprep.subr.mxu0 0.0
    %416 = vmatpush1.msra.mxu0 0.0
    %417 = vmatprep.subr.mxu0 0.0
    %418 = vmatpush1.msra.mxu0 0.0
    %419 = vmatprep.subr.mxu0 0.0
    %420 = vmatpush1.msra.mxu0 0.0
    %421 = vmatprep.subr.mxu0 0.0
    %422 = vmatpush1.msra.mxu0 0.0
    %423 = vmatprep.subr.mxu0 0.0
    %424 = vmatpush1.msra.mxu0 0.0
    %425 = vmatprep.subr.mxu0 0.0
    %426 = vmatpush1.msra.mxu0 0.0
    %427 = vmatprep.subr.mxu0 0.0
    %428 = vmatpush1.msra.mxu0 0.0
    %429 = vmatprep.subr.mxu0 0.0
    %430 = vmatpush1.msra.mxu0 0.0
    %431 = vmatprep.subr.mxu0 0.0
    %432 = vmatpush1.msra.mxu0 0.0
    %433 = vmatprep.subr.mxu0 0.0
    %434 = vmatpush1.msra.mxu0 0.0
    %435 = vmatprep.subr.mxu0 0.0
    %436 = vmatpush1.msra.mxu0 0.0
    %437 = vmatprep.mubr.f32.mxu0 0.0
    %438 = vmatmul.mubr.f32.gmra.mrb[0].mxu0 %v371
    %v439 = vpop.f32.mrb[0].mxu0
    %v440 = vadd.f32 %v118, %v439
    %v441 = vpop.f32.mrb[0].mxu0
    %442 = vdwg.mxu0
    %v443 = vsel %vm195, %v440, -inf
    %444 = vmax.xlane.f32.xlu0 %v443
    %v445 = vpop.xlane.xlu0 %444
    %v446 = vsub.f32 %v440, %v445
    %v447 = vmul.f32 %v446, 1.442695
    %v448 = vpow.pop %v447
    %v449 = vsel %vm195, %v448, 0.0
    %450 = vadd.xlane.f32.xlu0 %v449
    %v451 = vpop.xlane.xlu0 %450
    %v452 = vrcp.pop %v451
    %v453 = vmul.f32 %v448, %v452
    %470 = vrot.lane.b32.xlu0 %v207, 120
    %v471 = vpop.permute.xlu0 %470
    %472 = vrot.lane.b32.xlu0 %v208, 120
    %v473 = vpop.permute.xlu0 %472
    %474 = vrot.lane.b32.xlu0 %v209, 120
    %v475 = vpop.permute.xlu0 %474
    %476 = vrot.lane.b32.xlu0 %v210, 120
    %v477 = vpop.permute.xlu0 %476
    %478 = vrot.lane.b32.xlu0 %v211, 120
    %v479 = vpop.permute.xlu0 %478
    %480 = vrot.lane.b32.xlu0 %v212, 120
    %v481 = vpop.permute.xlu0 %480
    %482 = vrot.lane.b32.xlu0 %v213, 120
    %v483 = vpop.permute.xlu0 %482
    %484 = vrot.lane.b32.xlu0 %v214, 120
    %v485 = vpop.permute.xlu0 %484
    %486 = vrot.lane.b32.xlu0 %v215, 120
    %v487 = vpop.permute.xlu0 %486
    %488 = vrot.lane.b32.xlu0 %v216, 120
    %v489 = vpop.permute.xlu0 %488
    %490 = vrot.lane.b32.xlu0 %v217, 120
    %v491 = vpop.permute.xlu0 %490
    %492 = vrot.lane.b32.xlu0 %v218, 120
    %v493 = vpop.permute.xlu0 %492
    %494 = vrot.lane.b32.xlu0 %v219, 120
    %v495 = vpop.permute.xlu0 %494
    %496 = vrot.lane.b32.xlu0 %v220, 120
    %v497 = vpop.permute.xlu0 %496
    %498 = vrot.lane.b32.xlu0 %v221, 120
    %v499 = vpop.permute.xlu0 %498
    %500 = vrot.lane.b32.xlu0 %v222, 120
    %v501 = vpop.permute.xlu0 %500
    %518 = vmatprep.subr.mxu0 0.0
    %519 = vmatpush1.msra.mxu0 %v471
    %520 = vmatprep.subr.mxu0 0.0
    %521 = vmatpush1.msra.mxu0 %v473
    %522 = vmatprep.subr.mxu0 0.0
    %523 = vmatpush1.msra.mxu0 %v475
    %524 = vmatprep.subr.mxu0 0.0
    %525 = vmatpush1.msra.mxu0 %v477
    %526 = vmatprep.subr.mxu0 0.0
    %527 = vmatpush1.msra.mxu0 %v479
    %528 = vmatprep.subr.mxu0 0.0
    %529 = vmatpush1.msra.mxu0 %v481
    %530 = vmatprep.subr.mxu0 0.0
    %531 = vmatpush1.msra.mxu0 %v483
    %532 = vmatprep.subr.mxu0 0.0
    %533 = vmatpush1.msra.mxu0 %v485
    %534 = vmatprep.subr.mxu0 0.0
    %535 = vmatpush1.msra.mxu0 %v487
    %536 = vmatprep.subr.mxu0 0.0
    %537 = vmatpush1.msra.mxu0 %v489
    %538 = vmatprep.subr.mxu0 0.0
    %539 = vmatpush1.msra.mxu0 %v491
    %540 = vmatprep.subr.mxu0 0.0
    %541 = vmatpush1.msra.mxu0 %v493
    %542 = vmatprep.subr.mxu0 0.0
    %543 = vmatpush1.msra.mxu0 %v495
    %544 = vmatprep.subr.mxu0 0.0
    %545 = vmatpush1.msra.mxu0 %v497
    %546 = vmatprep.subr.mxu0 0.0
    %547 = vmatpush1.msra.mxu0 %v499
    %548 = vmatprep.subr.mxu0 0.0
    %549 = vmatpush1.msra.mxu0 %v501
    %550 = vmatprep.subr.mxu0 0.0
    %551 = vmatpush1.msra.mxu0 0.0
    %552 = vmatprep.subr.mxu0 0.0
    %553 = vmatpush1.msra.mxu0 0.0
    %554 = vmatprep.subr.mxu0 0.0
    %555 = vmatpush1.msra.mxu0 0.0
    %556 = vmatprep.subr.mxu0 0.0
    %557 = vmatpush1.msra.mxu0 0.0
    %558 = vmatprep.subr.mxu0 0.0
    %559 = vmatpush1.msra.mxu0 0.0
    %560 = vmatprep.subr.mxu0 0.0
    %561 = vmatpush1.msra.mxu0 0.0
    %562 = vmatprep.subr.mxu0 0.0
    %563 = vmatpush1.msra.mxu0 0.0
    %564 = vmatprep.subr.mxu0 0.0
    %565 = vmatpush1.msra.mxu0 0.0
    %566 = vmatprep.subr.mxu0 0.0
    %567 = vmatpush1.msra.mxu0 0.0
    %568 = vmatprep.subr.mxu0 0.0
    %569 = vmatpush1.msra.mxu0 0.0
    %570 = vmatprep.subr.mxu0 0.0
    %571 = vmatpush1.msra.mxu0 0.0
    %572 = vmatprep.subr.mxu0 0.0
    %573 = vmatpush1.msra.mxu0 0.0
    %574 = vmatprep.subr.mxu0 0.0
    %575 = vmatpush1.msra.mxu0 0.0
    %576 = vmatprep.subr.mxu0 0.0
    %577 = vmatpush1.msra.mxu0 0.0
    %578 = vmatprep.subr.mxu0 0.0
    %579 = vmatpush1.msra.mxu0 0.0
    %580 = vmatprep.subr.mxu0 0.0
    %581 = vmatpush1.msra.mxu0 0.0
    %582 = vmatprep.mubr.f32.mxu0 0.0
    %583 = vmatmul.mubr.f32.gmra.mrb[0].mxu0 %v453
    %v584 = vpop.f32.mrb[0].mxu0
    %v585 = vadd.f32 0.0, %v584
    %v586 = vpop.f32.mrb[0].mxu0
    %587 = vdwg.mxu0
    %v588 = vld [vmem:[%s5 + $0x8] sm:$0xff]
    %v590 = vsel %vm121, %v585, 0
    %592 = vmatprep.subr.mxu0 0.0
    %593 = vmatpush1.msra.mxu0 %v588
    %594 = vmatprep.subr.mxu0 0.0
    %595 = vmatpush1.msra.mxu0 0.0
    %596 = vmatprep.subr.mxu0 0.0
    %597 = vmatpush1.msra.mxu0 0.0
    %598 = vmatprep.subr.mxu0 0.0
    %599 = vmatpush1.msra.mxu0 0.0
    %600 = vmatprep.subr.mxu0 0.0
    %601 = vmatpush1.msra.mxu0 0.0
    %602 = vmatprep.subr.mxu0 0.0
    %603 = vmatpush1.msra.mxu0 0.0
    %604 = vmatprep.subr.mxu0 0.0
    %605 = vmatpush1.msra.mxu0 0.0
    %606 = vmatprep.subr.mxu0 0.0
    %607 = vmatpush1.msra.mxu0 0.0
    %608 = vmatprep.subr.mxu0 0.0
    %609 = vmatpush1.msra.mxu0 0.0
    %610 = vmatprep.subr.mxu0 0.0
    %611 = vmatpush1.msra.mxu0 0.0
    %612 = vmatprep.subr.mxu0 0.0
    %613 = vmatpush1.msra.mxu0 0.0
    %614 = vmatprep.subr.mxu0 0.0
    %615 = vmatpush1.msra.mxu0 0.0
    %616 = vmatprep.subr.mxu0 0.0
    %617 = vmatpush1.msra.mxu0 0.0
    %618 = vmatprep.subr.mxu0 0.0
    %619 = vmatpush1.msra.mxu0 0.0
    %620 = vmatprep.subr.mxu0 0.0
    %621 = vmatpush1.msra.mxu0 0.0
    %622 = vmatprep.subr.mxu0 0.0
    %623 = vmatpush1.msra.mxu0 0.0
    %624 = vmatprep.subr.mxu0 0.0
    %625 = vmatpush1.msra.mxu0 0.0
    %626 = vmatprep.subr.mxu0 0.0
    %627 = vmatpush1.msra.mxu0 0.0
    %628 = vmatprep.subr.mxu0 0.0
    %629 = vmatpush1.msra.mxu0 0.0
    %630 = vmatprep.subr.mxu0 0.0
    %631 = vmatpush1.msra.mxu0 0.0
    %632 = vmatprep.subr.mxu0 0.0
    %633 = vmatpush1.msra.mxu0 0.0
    %634 = vmatprep.subr.mxu0 0.0
    %635 = vmatpush1.msra.mxu0 0.0
    %636 = vmatprep.subr.mxu0 0.0
    %637 = vmatpush1.msra.mxu0 0.0
    %638 = vmatprep.subr.mxu0 0.0
    %639 = vmatpush1.msra.mxu0 0.0
    %640 = vmatprep.subr.mxu0 0.0
    %641 = vmatpush1.msra.mxu0 0.0
    %642 = vmatprep.subr.mxu0 0.0
    %643 = vmatpush1.msra.mxu0 0.0
    %644 = vmatprep.subr.mxu0 0.0
    %645 = vmatpush1.msra.mxu0 0.0
    %646 = vmatprep.subr.mxu0 0.0
    %647 = vmatpush1.msra.mxu0 0.0
    %648 = vmatprep.subr.mxu0 0.0
    %649 = vmatpush1.msra.mxu0 0.0
    %650 = vmatprep.subr.mxu0 0.0
    %651 = vmatpush1.msra.mxu0 0.0
    %652 = vmatprep.subr.mxu0 0.0
    %653 = vmatpush1.msra.mxu0 0.0
    %654 = vmatprep.subr.mxu0 0.0
    %655 = vmatpush1.msra.mxu0 0.0
    %656 = vmatprep.mubr.f32.mxu0 0.0
    %657 = vmatmul.mubr.f32.gmra.mrb[0].mxu0 %v590
    %v658 = vpop.f32.mrb[0].mxu0
    %v659 = vadd.f32 0.0, %v658
    %v660 = vpop.f32.mrb[0].mxu0
    %661 = vdwg.mxu0
    %v662 = vadd.f32 %v367, %v659
    %v663 = vld [vmem:[%s3 + $0x10] sm:$0xff]
    %664 = vrot.lane.b32.xlu0 %v115, 112
    %v665 = vpop.permute.xlu0 %664
    %v666 = vsel %vm121, %v665, 0
    %668 = vmatprep.subr.mxu0 0.0
    %669 = vmatpush1.msra.mxu0 %v663
    %670 = vmatprep.subr.mxu0 0.0
    %671 = vmatpush1.msra.mxu0 0.0
    %672 = vmatprep.subr.mxu0 0.0
    %673 = vmatpush1.msra.mxu0 0.0
    %674 = vmatprep.subr.mxu0 0.0
    %675 = vmatpush1.msra.mxu0 0.0
    %676 = vmatprep.subr.mxu0 0.0
    %677 = vmatpush1.msra.mxu0 0.0
    %678 = vmatprep.subr.mxu0 0.0
    %679 = vmatpush1.msra.mxu0 0.0
    %680 = vmatprep.subr.mxu0 0.0
    %681 = vmatpush1.msra.mxu0 0.0
    %682 = vmatprep.subr.mxu0 0.0
    %683 = vmatpush1.msra.mxu0 0.0
    %684 = vmatprep.subr.mxu0 0.0
    %685 = vmatpush1.msra.mxu0 0.0
    %686 = vmatprep.subr.mxu0 0.0
    %687 = vmatpush1.msra.mxu0 0.0
    %688 = vmatprep.subr.mxu0 0.0
    %689 = vmatpush1.msra.mxu0 0.0
    %690 = vmatprep.subr.mxu0 0.0
    %691 = vmatpush1.msra.mxu0 0.0
    %692 = vmatprep.subr.mxu0 0.0
    %693 = vmatpush1.msra.mxu0 0.0
    %694 = vmatprep.subr.mxu0 0.0
    %695 = vmatpush1.msra.mxu0 0.0
    %696 = vmatprep.subr.mxu0 0.0
    %697 = vmatpush1.msra.mxu0 0.0
    %698 = vmatprep.subr.mxu0 0.0
    %699 = vmatpush1.msra.mxu0 0.0
    %700 = vmatprep.subr.mxu0 0.0
    %701 = vmatpush1.msra.mxu0 0.0
    %702 = vmatprep.subr.mxu0 0.0
    %703 = vmatpush1.msra.mxu0 0.0
    %704 = vmatprep.subr.mxu0 0.0
    %705 = vmatpush1.msra.mxu0 0.0
    %706 = vmatprep.subr.mxu0 0.0
    %707 = vmatpush1.msra.mxu0 0.0
    %708 = vmatprep.subr.mxu0 0.0
    %709 = vmatpush1.msra.mxu0 0.0
    %710 = vmatprep.subr.mxu0 0.0
    %711 = vmatpush1.msra.mxu0 0.0
    %712 = vmatprep.subr.mxu0 0.0
    %713 = vmatpush1.msra.mxu0 0.0
    %714 = vmatprep.subr.mxu0 0.0
    %715 = vmatpush1.msra.mxu0 0.0
    %716 = vmatprep.subr.mxu0 0.0
    %717 = vmatpush1.msra.mxu0 0.0
    %718 = vmatprep.subr.mxu0 0.0
    %719 = vmatpush1.msra.mxu0 0.0
    %720 = vmatprep.subr.mxu0 0.0
    %721 = vmatpush1.msra.mxu0 0.0
    %722 = vmatprep.subr.mxu0 0.0
    %723 = vmatpush1.msra.mxu0 0.0
    %724 = vmatprep.subr.mxu0 0.0
    %725 = vmatpush1.msra.mxu0 0.0
    %726 = vmatprep.subr.mxu0 0.0
    %727 = vmatpush1.msra.mxu0 0.0
    %728 = vmatprep.subr.mxu0 0.0
    %729 = vmatpush1.msra.mxu0 0.0
    %730 = vmatprep.subr.mxu0 0.0
    %731 = vmatpush1.msra.mxu0 0.0
    %732 = vmatprep.mubr.f32.mxu0 0.0
    %733 = vmatmul.mubr.f32.gmra.mrb[0].mxu0 %v666
    %v734 = vpop.f32.mrb[0].mxu0
    %v735 = vadd.f32 %v118, %v734
    %v736 = vpop.f32.mrb[0].mxu0
    %737 = vdwg.mxu0
    %v738 = vsel %vm195, %v735, -inf
    %739 = vmax.xlane.f32.xlu0 %v738
    %v740 = vpop.xlane.xlu0 %739
    %v741 = vsub.f32 %v735, %v740
    %v742 = vmul.f32 %v741, 1.442695
    %v743 = vpow.pop %v742
    %v744 = vsel %vm195, %v743, 0.0
    %745 = vadd.xlane.f32.xlu0 %v744
    %v746 = vpop.xlane.xlu0 %745
    %v747 = vrcp.pop %v746
    %v748 = vmul.f32 %v743, %v747
    %749 = vrot.lane.b32.xlu0 %v207, 112
    %v750 = vpop.permute.xlu0 %749
    %751 = vrot.lane.b32.xlu0 %v208, 112
    %v752 = vpop.permute.xlu0 %751
    %753 = vrot.lane.b32.xlu0 %v209, 112
    %v754 = vpop.permute.xlu0 %753
    %755 = vrot.lane.b32.xlu0 %v210, 112
    %v756 = vpop.permute.xlu0 %755
    %757 = vrot.lane.b32.xlu0 %v211, 112
    %v758 = vpop.permute.xlu0 %757
    %759 = vrot.lane.b32.xlu0 %v212, 112
    %v760 = vpop.permute.xlu0 %759
    %761 = vrot.lane.b32.xlu0 %v213, 112
    %v762 = vpop.permute.xlu0 %761
    %763 = vrot.lane.b32.xlu0 %v214, 112
    %v764 = vpop.permute.xlu0 %763
    %765 = vrot.lane.b32.xlu0 %v215, 112
    %v766 = vpop.permute.xlu0 %765
    %767 = vrot.lane.b32.xlu0 %v216, 112
    %v768 = vpop.permute.xlu0 %767
    %769 = vrot.lane.b32.xlu0 %v217, 112
    %v770 = vpop.permute.xlu0 %769
    %771 = vrot.lane.b32.xlu0 %v218, 112
    %v772 = vpop.permute.xlu0 %771
    %773 = vrot.lane.b32.xlu0 %v219, 112
    %v774 = vpop.permute.xlu0 %773
    %775 = vrot.lane.b32.xlu0 %v220, 112
    %v776 = vpop.permute.xlu0 %775
    %777 = vrot.lane.b32.xlu0 %v221, 112
    %v778 = vpop.permute.xlu0 %777
    %779 = vrot.lane.b32.xlu0 %v222, 112
    %v780 = vpop.permute.xlu0 %779
    %797 = vmatprep.subr.mxu0 0.0
    %798 = vmatpush1.msra.mxu0 %v750
    %799 = vmatprep.subr.mxu0 0.0
    %800 = vmatpush1.msra.mxu0 %v752
    %801 = vmatprep.subr.mxu0 0.0
    %802 = vmatpush1.msra.mxu0 %v754
    %803 = vmatprep.subr.mxu0 0.0
    %804 = vmatpush1.msra.mxu0 %v756
    %805 = vmatprep.subr.mxu0 0.0
    %806 = vmatpush1.msra.mxu0 %v758
    %807 = vmatprep.subr.mxu0 0.0
    %808 = vmatpush1.msra.mxu0 %v760
    %809 = vmatprep.subr.mxu0 0.0
    %810 = vmatpush1.msra.mxu0 %v762
    %811 = vmatprep.subr.mxu0 0.0
    %812 = vmatpush1.msra.mxu0 %v764
    %813 = vmatprep.subr.mxu0 0.0
    %814 = vmatpush1.msra.mxu0 %v766
    %815 = vmatprep.subr.mxu0 0.0
    %816 = vmatpush1.msra.mxu0 %v768
    %817 = vmatprep.subr.mxu0 0.0
    %818 = vmatpush1.msra.mxu0 %v770
    %819 = vmatprep.subr.mxu0 0.0
    %820 = vmatpush1.msra.mxu0 %v772
    %821 = vmatprep.subr.mxu0 0.0
    %822 = vmatpush1.msra.mxu0 %v774
    %823 = vmatprep.subr.mxu0 0.0
    %824 = vmatpush1.msra.mxu0 %v776
    %825 = vmatprep.subr.mxu0 0.0
    %826 = vmatpush1.msra.mxu0 %v778
    %827 = vmatprep.subr.mxu0 0.0
    %828 = vmatpush1.msra.mxu0 %v780
    %829 = vmatprep.subr.mxu0 0.0
    %830 = vmatpush1.msra.mxu0 0.0
    %831 = vmatprep.subr.mxu0 0.0
    %832 = vmatpush1.msra.mxu0 0.0
    %833 = vmatprep.subr.mxu0 0.0
    %834 = vmatpush1.msra.mxu0 0.0
    %835 = vmatprep.subr.mxu0 0.0
    %836 = vmatpush1.msra.mxu0 0.0
    %837 = vmatprep.subr.mxu0 0.0
    %838 = vmatpush1.msra.mxu0 0.0
    %839 = vmatprep.subr.mxu0 0.0
    %840 = vmatpush1.msra.mxu0 0.0
    %841 = vmatprep.subr.mxu0 0.0
    %842 = vmatpush1.msra.mxu0 0.0
    %843 = vmatprep.subr.mxu0 0.0
    %844 = vmatpush1.msra.mxu0 0.0
    %845 = vmatprep.subr.mxu0 0.0
    %846 = vmatpush1.msra.mxu0 0.0
    %847 = vmatprep.subr.mxu0 0.0
    %848 = vmatpush1.msra.mxu0 0.0
    %849 = vmatprep.subr.mxu0 0.0
    %850 = vmatpush1.msra.mxu0 0.0
    %851 = vmatprep.subr.mxu0 0.0
    %852 = vmatpush1.msra.mxu0 0.0
    %853 = vmatprep.subr.mxu0 0.0
    %854 = vmatpush1.msra.mxu0 0.0
    %855 = vmatprep.subr.mxu0 0.0
    %856 = vmatpush1.msra.mxu0 0.0
    %857 = vmatprep.subr.mxu0 0.0
    %858 = vmatpush1.msra.mxu0 0.0
    %859 = vmatprep.subr.mxu0 0.0
    %860 = vmatpush1.msra.mxu0 0.0
    %861 = vmatprep.mubr.f32.mxu0 0.0
    %862 = vmatmul.mubr.f32.gmra.mrb[0].mxu0 %v748
    %v863 = vpop.f32.mrb[0].mxu0
    %v864 = vadd.f32 0.0, %v863
    %v865 = vpop.f32.mrb[0].mxu0
    %866 = vdwg.mxu0
    %v867 = vld [vmem:[%s5 + $0x10] sm:$0xff]
    %v869 = vsel %vm121, %v864, 0
    %871 = vmatprep.subr.mxu0 0.0
    %872 = vmatpush1.msra.mxu0 %v867
    %873 = vmatprep.subr.mxu0 0.0
    %874 = vmatpush1.msra.mxu0 0.0
    %875 = vmatprep.subr.mxu0 0.0
    %876 = vmatpush1.msra.mxu0 0.0
    %877 = vmatprep.subr.mxu0 0.0
    %878 = vmatpush1.msra.mxu0 0.0
    %879 = vmatprep.subr.mxu0 0.0
    %880 = vmatpush1.msra.mxu0 0.0
    %881 = vmatprep.subr.mxu0 0.0
    %882 = vmatpush1.msra.mxu0 0.0
    %883 = vmatprep.subr.mxu0 0.0
    %884 = vmatpush1.msra.mxu0 0.0
    %885 = vmatprep.subr.mxu0 0.0
    %886 = vmatpush1.msra.mxu0 0.0
    %887 = vmatprep.subr.mxu0 0.0
    %888 = vmatpush1.msra.mxu0 0.0
    %889 = vmatprep.subr.mxu0 0.0
    %890 = vmatpush1.msra.mxu0 0.0
    %891 = vmatprep.subr.mxu0 0.0
    %892 = vmatpush1.msra.mxu0 0.0
    %893 = vmatprep.subr.mxu0 0.0
    %894 = vmatpush1.msra.mxu0 0.0
    %895 = vmatprep.subr.mxu0 0.0
    %896 = vmatpush1.msra.mxu0 0.0
    %897 = vmatprep.subr.mxu0 0.0
    %898 = vmatpush1.msra.mxu0 0.0
    %899 = vmatprep.subr.mxu0 0.0
    %900 = vmatpush1.msra.mxu0 0.0
    %901 = vmatprep.subr.mxu0 0.0
    %902 = vmatpush1.msra.mxu0 0.0
    %903 = vmatprep.subr.mxu0 0.0
    %904 = vmatpush1.msra.mxu0 0.0
    %905 = vmatprep.subr.mxu0 0.0
    %906 = vmatpush1.msra.mxu0 0.0
    %907 = vmatprep.subr.mxu0 0.0
    %908 = vmatpush1.msra.mxu0 0.0
    %909 = vmatprep.subr.mxu0 0.0
    %910 = vmatpush1.msra.mxu0 0.0
    %911 = vmatprep.subr.mxu0 0.0
    %912 = vmatpush1.msra.mxu0 0.0
    %913 = vmatprep.subr.mxu0 0.0
    %914 = vmatpush1.msra.mxu0 0.0
    %915 = vmatprep.subr.mxu0 0.0
    %916 = vmatpush1.msra.mxu0 0.0
    %917 = vmatprep.subr.mxu0 0.0
    %918 = vmatpush1.msra.mxu0 0.0
    %919 = vmatprep.subr.mxu0 0.0
    %920 = vmatpush1.msra.mxu0 0.0
    %921 = vmatprep.subr.mxu0 0.0
    %922 = vmatpush1.msra.mxu0 0.0
    %923 = vmatprep.subr.mxu0 0.0
    %924 = vmatpush1.msra.mxu0 0.0
    %925 = vmatprep.subr.mxu0 0.0
    %926 = vmatpush1.msra.mxu0 0.0
    %927 = vmatprep.subr.mxu0 0.0
    %928 = vmatpush1.msra.mxu0 0.0
    %929 = vmatprep.subr.mxu0 0.0
    %930 = vmatpush1.msra.mxu0 0.0
    %931 = vmatprep.subr.mxu0 0.0
    %932 = vmatpush1.msra.mxu0 0.0
    %933 = vmatprep.subr.mxu0 0.0
    %934 = vmatpush1.msra.mxu0 0.0
    %935 = vmatprep.mubr.f32.mxu0 0.0
    %936 = vmatmul.mubr.f32.gmra.mrb[0].mxu0 %v869
    %v937 = vpop.f32.mrb[0].mxu0
    %v938 = vadd.f32 0.0, %v937
    %v939 = vpop.f32.mrb[0].mxu0
    %940 = vdwg.mxu0
    %v941 = vadd.f32 %v662, %v938
    %v942 = vld [vmem:[%s3 + $0x18] sm:$0xff]
    %943 = vrot.lane.b32.xlu0 %v115, 104
    %v944 = vpop.permute.xlu0 %943
    %v945 = vsel %vm121, %v944, 0
    %947 = vmatprep.subr.mxu0 0.0
    %948 = vmatpush1.msra.mxu0 %v942
    %949 = vmatprep.subr.mxu0 0.0
    %950 = vmatpush1.msra.mxu0 0.0
    %951 = vmatprep.subr.mxu0 0.0
    %952 = vmatpush1.msra.mxu0 0.0
    %953 = vmatprep.subr.mxu0 0.0
    %954 = vmatpush1.msra.mxu0 0.0
    %955 = vmatprep.subr.mxu0 0.0
    %956 = vmatpush1.msra.mxu0 0.0
    %957 = vmatprep.subr.mxu0 0.0
    %958 = vmatpush1.msra.mxu0 0.0
    %959 = vmatprep.subr.mxu0 0.0
    %960 = vmatpush1.msra.mxu0 0.0
    %961 = vmatprep.subr.mxu0 0.0
    %962 = vmatpush1.msra.mxu0 0.0
    %963 = vmatprep.subr.mxu0 0.0
    %964 = vmatpush1.msra.mxu0 0.0
    %965 = vmatprep.subr.mxu0 0.0
    %966 = vmatpush1.msra.mxu0 0.0
    %967 = vmatprep.subr.mxu0 0.0
    %968 = vmatpush1.msra.mxu0 0.0
    %969 = vmatprep.subr.mxu0 0.0
    %970 = vmatpush1.msra.mxu0 0.0
    %971 = vmatprep.subr.mxu0 0.0
    %972 = vmatpush1.msra.mxu0 0.0
    %973 = vmatprep.subr.mxu0 0.0
    %974 = vmatpush1.msra.mxu0 0.0
    %975 = vmatprep.subr.mxu0 0.0
    %976 = vmatpush1.msra.mxu0 0.0
    %977 = vmatprep.subr.mxu0 0.0
    %978 = vmatpush1.msra.mxu0 0.0
    %979 = vmatprep.subr.mxu0 0.0
    %980 = vmatpush1.msra.mxu0 0.0
    %981 = vmatprep.subr.mxu0 0.0
    %982 = vmatpush1.msra.mxu0 0.0
    %983 = vmatprep.subr.mxu0 0.0
    %984 = vmatpush1.msra.mxu0 0.0
    %985 = vmatprep.subr.mxu0 0.0
    %986 = vmatpush1.msra.mxu0 0.0
    %987 = vmatprep.subr.mxu0 0.0
    %988 = vmatpush1.msra.mxu0 0.0
    %989 = vmatprep.subr.mxu0 0.0
    %990 = vmatpush1.msra.mxu0 0.0
    %991 = vmatprep.subr.mxu0 0.0
    %992 = vmatpush1.msra.mxu0 0.0
    %993 = vmatprep.subr.mxu0 0.0
    %994 = vmatpush1.msra.mxu0 0.0
    %995 = vmatprep.subr.mxu0 0.0
    %996 = vmatpush1.msra.mxu0 0.0
    %997 = vmatprep.subr.mxu0 0.0
    %998 = vmatpush1.msra.mxu0 0.0
    %999 = vmatprep.subr.mxu0 0.0
    %1000 = vmatpush1.msra.mxu0 0.0
    %1001 = vmatprep.subr.mxu0 0.0
    %1002 = vmatpush1.msra.mxu0 0.0
    %1003 = vmatprep.subr.mxu0 0.0
    %1004 = vmatpush1.msra.mxu0 0.0
    %1005 = vmatprep.subr.mxu0 0.0
    %1006 = vmatpush1.msra.mxu0 0.0
    %1007 = vmatprep.subr.mxu0 0.0
    %1008 = vmatpush1.msra.mxu0 0.0
    %1009 = vmatprep.subr.mxu0 0.0
    %1010 = vmatpush1.msra.mxu0 0.0
    %1011 = vmatprep.mubr.f32.mxu0 0.0
    %1012 = vmatmul.mubr.f32.gmra.mrb[0].mxu0 %v945
    %v1013 = vpop.f32.mrb[0].mxu0
    %v1014 = vadd.f32 %v118, %v1013
    %v1015 = vpop.f32.mrb[0].mxu0
    %1016 = vdwg.mxu0
    %v1017 = vsel %vm195, %v1014, -inf
    %1018 = vmax.xlane.f32.xlu0 %v1017
    %v1019 = vpop.xlane.xlu0 %1018
    %v1020 = vsub.f32 %v1014, %v1019
    %v1021 = vmul.f32 %v1020, 1.442695
    %v1022 = vpow.pop %v1021
    %v1023 = vsel %vm195, %v1022, 0.0
    %1024 = vadd.xlane.f32.xlu0 %v1023
    %v1025 = vpop.xlane.xlu0 %1024
    %v1026 = vrcp.pop %v1025
    %v1027 = vmul.f32 %v1022, %v1026
    %1028 = vrot.lane.b32.xlu0 %v207, 104
    %v1029 = vpop.permute.xlu0 %1028
    %1030 = vrot.lane.b32.xlu0 %v208, 104
    %v1031 = vpop.permute.xlu0 %1030
    %1032 = vrot.lane.b32.xlu0 %v209, 104
    %v1033 = vpop.permute.xlu0 %1032
    %1034 = vrot.lane.b32.xlu0 %v210, 104
    %v1035 = vpop.permute.xlu0 %1034
    %1036 = vrot.lane.b32.xlu0 %v211, 104
    %v1037 = vpop.permute.xlu0 %1036
    %1038 = vrot.lane.b32.xlu0 %v212, 104
    %v1039 = vpop.permute.xlu0 %1038
    %1040 = vrot.lane.b32.xlu0 %v213, 104
    %v1041 = vpop.permute.xlu0 %1040
    %1042 = vrot.lane.b32.xlu0 %v214, 104
    %v1043 = vpop.permute.xlu0 %1042
    %1044 = vrot.lane.b32.xlu0 %v215, 104
    %v1045 = vpop.permute.xlu0 %1044
    %1046 = vrot.lane.b32.xlu0 %v216, 104
    %v1047 = vpop.permute.xlu0 %1046
    %1048 = vrot.lane.b32.xlu0 %v217, 104
    %v1049 = vpop.permute.xlu0 %1048
    %1050 = vrot.lane.b32.xlu0 %v218, 104
    %v1051 = vpop.permute.xlu0 %1050
    %1052 = vrot.lane.b32.xlu0 %v219, 104
    %v1053 = vpop.permute.xlu0 %1052
    %1054 = vrot.lane.b32.xlu0 %v220, 104
    %v1055 = vpop.permute.xlu0 %1054
    %1056 = vrot.lane.b32.xlu0 %v221, 104
    %v1057 = vpop.permute.xlu0 %1056
    %1058 = vrot.lane.b32.xlu0 %v222, 104
    %v1059 = vpop.permute.xlu0 %1058
    %1076 = vmatprep.subr.mxu0 0.0
    %1077 = vmatpush1.msra.mxu0 %v1029
    %1078 = vmatprep.subr.mxu0 0.0
    %1079 = vmatpush1.msra.mxu0 %v1031
    %1080 = vmatprep.subr.mxu0 0.0
    %1081 = vmatpush1.msra.mxu0 %v1033
    %1082 = vmatprep.subr.mxu0 0.0
    %1083 = vmatpush1.msra.mxu0 %v1035
    %1084 = vmatprep.subr.mxu0 0.0
    %1085 = vmatpush1.msra.mxu0 %v1037
    %1086 = vmatprep.subr.mxu0 0.0
    %1087 = vmatpush1.msra.mxu0 %v1039
    %1088 = vmatprep.subr.mxu0 0.0
    %1089 = vmatpush1.msra.mxu0 %v1041
    %1090 = vmatprep.subr.mxu0 0.0
    %1091 = vmatpush1.msra.mxu0 %v1043
    %1092 = vmatprep.subr.mxu0 0.0
    %1093 = vmatpush1.msra.mxu0 %v1045
    %1094 = vmatprep.subr.mxu0 0.0
    %1095 = vmatpush1.msra.mxu0 %v1047
    %1096 = vmatprep.subr.mxu0 0.0
    %1097 = vmatpush1.msra.mxu0 %v1049
    %1098 = vmatprep.subr.mxu0 0.0
    %1099 = vmatpush1.msra.mxu0 %v1051
    %1100 = vmatprep.subr.mxu0 0.0
    %1101 = vmatpush1.msra.mxu0 %v1053
    %1102 = vmatprep.subr.mxu0 0.0
    %1103 = vmatpush1.msra.mxu0 %v1055
    %1104 = vmatprep.subr.mxu0 0.0
    %1105 = vmatpush1.msra.mxu0 %v1057
    %1106 = vmatprep.subr.mxu0 0.0
    %1107 = vmatpush1.msra.mxu0 %v1059
    %1108 = vmatprep.subr.mxu0 0.0
    %1109 = vmatpush1.msra.mxu0 0.0
    %1110 = vmatprep.subr.mxu0 0.0
    %1111 = vmatpush1.msra.mxu0 0.0
    %1112 = vmatprep.subr.mxu0 0.0
    %1113 = vmatpush1.msra.mxu0 0.0
    %1114 = vmatprep.subr.mxu0 0.0
    %1115 = vmatpush1.msra.mxu0 0.0
    %1116 = vmatprep.subr.mxu0 0.0
    %1117 = vmatpush1.msra.mxu0 0.0
    %1118 = vmatprep.subr.mxu0 0.0
    %1119 = vmatpush1.msra.mxu0 0.0
    %1120 = vmatprep.subr.mxu0 0.0
    %1121 = vmatpush1.msra.mxu0 0.0
    %1122 = vmatprep.subr.mxu0 0.0
    %1123 = vmatpush1.msra.mxu0 0.0
    %1124 = vmatprep.subr.mxu0 0.0
    %1125 = vmatpush1.msra.mxu0 0.0
    %1126 = vmatprep.subr.mxu0 0.0
    %1127 = vmatpush1.msra.mxu0 0.0
    %1128 = vmatprep.subr.mxu0 0.0
    %1129 = vmatpush1.msra.mxu0 0.0
    %1130 = vmatprep.subr.mxu0 0.0
    %1131 = vmatpush1.msra.mxu0 0.0
    %1132 = vmatprep.subr.mxu0 0.0
    %1133 = vmatpush1.msra.mxu0 0.0
    %1134 = vmatprep.subr.mxu0 0.0
    %1135 = vmatpush1.msra.mxu0 0.0
    %1136 = vmatprep.subr.mxu0 0.0
    %1137 = vmatpush1.msra.mxu0 0.0
    %1138 = vmatprep.subr.mxu0 0.0
    %1139 = vmatpush1.msra.mxu0 0.0
    %1140 = vmatprep.mubr.f32.mxu0 0.0
    %1141 = vmatmul.mubr.f32.gmra.mrb[0].mxu0 %v1027
    %v1142 = vpop.f32.mrb[0].mxu0
    %v1143 = vadd.f32 0.0, %v1142
    %v1144 = vpop.f32.mrb[0].mxu0
    %1145 = vdwg.mxu0
    %v1146 = vld [vmem:[%s5 + $0x18] sm:$0xff]
    %v1148 = vsel %vm121, %v1143, 0
    %1150 = vmatprep.subr.mxu0 0.0
    %1151 = vmatpush1.msra.mxu0 %v1146
    %1152 = vmatprep.subr.mxu0 0.0
    %1153 = vmatpush1.msra.mxu0 0.0
    %1154 = vmatprep.subr.mxu0 0.0
    %1155 = vmatpush1.msra.mxu0 0.0
    %1156 = vmatprep.subr.mxu0 0.0
    %1157 = vmatpush1.msra.mxu0 0.0
    %1158 = vmatprep.subr.mxu0 0.0
    %1159 = vmatpush1.msra.mxu0 0.0
    %1160 = vmatprep.subr.mxu0 0.0
    %1161 = vmatpush1.msra.mxu0 0.0
    %1162 = vmatprep.subr.mxu0 0.0
    %1163 = vmatpush1.msra.mxu0 0.0
    %1164 = vmatprep.subr.mxu0 0.0
    %1165 = vmatpush1.msra.mxu0 0.0
    %1166 = vmatprep.subr.mxu0 0.0
    %1167 = vmatpush1.msra.mxu0 0.0
    %1168 = vmatprep.subr.mxu0 0.0
    %1169 = vmatpush1.msra.mxu0 0.0
    %1170 = vmatprep.subr.mxu0 0.0
    %1171 = vmatpush1.msra.mxu0 0.0
    %1172 = vmatprep.subr.mxu0 0.0
    %1173 = vmatpush1.msra.mxu0 0.0
    %1174 = vmatprep.subr.mxu0 0.0
    %1175 = vmatpush1.msra.mxu0 0.0
    %1176 = vmatprep.subr.mxu0 0.0
    %1177 = vmatpush1.msra.mxu0 0.0
    %1178 = vmatprep.subr.mxu0 0.0
    %1179 = vmatpush1.msra.mxu0 0.0
    %1180 = vmatprep.subr.mxu0 0.0
    %1181 = vmatpush1.msra.mxu0 0.0
    %1182 = vmatprep.subr.mxu0 0.0
    %1183 = vmatpush1.msra.mxu0 0.0
    %1184 = vmatprep.subr.mxu0 0.0
    %1185 = vmatpush1.msra.mxu0 0.0
    %1186 = vmatprep.subr.mxu0 0.0
    %1187 = vmatpush1.msra.mxu0 0.0
    %1188 = vmatprep.subr.mxu0 0.0
    %1189 = vmatpush1.msra.mxu0 0.0
    %1190 = vmatprep.subr.mxu0 0.0
    %1191 = vmatpush1.msra.mxu0 0.0
    %1192 = vmatprep.subr.mxu0 0.0
    %1193 = vmatpush1.msra.mxu0 0.0
    %1194 = vmatprep.subr.mxu0 0.0
    %1195 = vmatpush1.msra.mxu0 0.0
    %1196 = vmatprep.subr.mxu0 0.0
    %1197 = vmatpush1.msra.mxu0 0.0
    %1198 = vmatprep.subr.mxu0 0.0
    %1199 = vmatpush1.msra.mxu0 0.0
    %1200 = vmatprep.subr.mxu0 0.0
    %1201 = vmatpush1.msra.mxu0 0.0
    %1202 = vmatprep.subr.mxu0 0.0
    %1203 = vmatpush1.msra.mxu0 0.0
    %1204 = vmatprep.subr.mxu0 0.0
    %1205 = vmatpush1.msra.mxu0 0.0
    %1206 = vmatprep.subr.mxu0 0.0
    %1207 = vmatpush1.msra.mxu0 0.0
    %1208 = vmatprep.subr.mxu0 0.0
    %1209 = vmatpush1.msra.mxu0 0.0
    %1210 = vmatprep.subr.mxu0 0.0
    %1211 = vmatpush1.msra.mxu0 0.0
    %1212 = vmatprep.subr.mxu0 0.0
    %1213 = vmatpush1.msra.mxu0 0.0
    %1214 = vmatprep.mubr.f32.mxu0 0.0
    %1215 = vmatmul.mubr.f32.gmra.mrb[0].mxu0 %v1148
    %v1216 = vpop.f32.mrb[0].mxu0
    %v1217 = vadd.f32 0.0, %v1216
    %v1218 = vpop.f32.mrb[0].mxu0
    %1219 = vdwg.mxu0
    %v1220 = vadd.f32 %v941, %v1217
    %v1221 = vsel %vm195, %v1220, -inf
    %1222 = vmax.xlane.f32.xlu0 %v1221
    %v1223 = vpop.xlane.xlu0 %1222
    %v1224 = vsub.f32 %v1220, %v1223
    %v1225 = vmul.f32 %v1224, 1.442695
    %v1226 = vpow.pop %v1225
    %v1227 = vsel %vm195, %v1226, 0.0
    %1228 = vadd.xlane.f32.xlu0 %v1227
    %v1229 = vpop.xlane.xlu0 %1228
    %v1230 = vrcp.pop %v1229
    %v1231 = vmul.f32 %v1226, %v1230
    %1232 = vst [vmem:[#allocation2] sm:$0x1] %v1231
    // Predicated region
    $region34: #{tpu_custom_call.1} parent=1 // pred_check
      _
    $region35: #{tpu_custom_call.1} parent=1 // pred_check_branch
      %1234 = sbr.rel (0) target = $region37
    $region36: #{tpu_custom_call.1} parent=1 // pred_region
      %s1236 = ssub.s32 16, 16
      %1237 = vsyncadd [#allocation3], %s1236
      %s1239 = sshll.u32 [#allocation2], 4
      %s1240 = int_to_ptr.vmem [resolvable:$true] %s1239
      %1242 = dma.vmem_to_hbm [thread:$0]  %s1240, 16, %s8, [#allocation3]
    $region37: #{tpu_custom_call.1} parent=1 // pred_fallthru
      _
    // Predicated region
    $region38: #{tpu_custom_call.1} parent=1 // pred_check
      _
    $region39: #{tpu_custom_call.1} parent=1 // pred_check_branch
      %1244 = sbr.rel (0) target = $region41
    $region40: #{tpu_custom_call.1} parent=1 // pred_region
      %1245 = dma.done [#allocation3], 16
    $region41: #{tpu_custom_call.1} parent=1 // pred_fallthru
      _
    %1246 = vsyncpa [#allocation3], 1

</llo_original>
